<compile_context>
chip_gen: v7x
topology: tpu7x:2x2x1
jax: 0.10.0
libtpu: 0.0.40
codegen_flags: <defaults>
</compile_context>

<pallas_src>
import functools

import numpy as np

import jax
import jax.numpy as jnp
from jax.experimental import pallas as pl
from jax.experimental.pallas import tpu as pltpu


_MIB = 1024 * 1024
# Conservative per-kernel working budget, sized for the most restrictive
# generation (v7x: 64 MiB physical / 32 MiB scoped default); v5e/v6e have more.
_VMEM_WORK_BUDGET = 24 * _MIB
_X_BLOCK_BUDGET = 12 * _MIB      # 2 double-buffered x blocks
_A_BLOCK_BUDGET = 8 * _MIB       # 2 double-buffered A tiles (streamed mode)


def _round_up(x, m):
    return (x + m - 1) // m * m


@functools.lru_cache(maxsize=64)
def _avg_matrix(l, kernel_size, stride, nt, tl, dtype_name):
    """Banded averaging matrix with edge-replication padding folded in.

    A[t, j] = #{i in [0,k): clip(t*stride + i - pad, 0, l-1) == j} / k.
    Rows >= l_out are zero (they land in masked ragged output tiles).
    Cached so repeated forward calls reuse the device-resident constant.
    """
    pad = (kernel_size - 1) // 2
    l_out = (l + 2 * pad - kernel_size) // stride + 1
    tt, ii = np.meshgrid(np.arange(l_out), np.arange(kernel_size), indexing="ij")
    src = np.clip(tt * stride + ii - pad, 0, l - 1)
    a = np.zeros((nt * tl, l), np.float32)
    np.add.at(a, (tt, src), 1.0 / kernel_size)
    return jnp.asarray(a.reshape(nt, tl, l), dtype=dtype_name)


def _mavg_resident_kernel(a_ref, x_ref, o_ref):
    # a_ref: (nt, tl, L)  whole averaging matrix, fetched once (constant index_map)
    # x_ref: (1, L, tc)   held across the inner time-tile axis
    # o_ref: (1, tl, tc)  one output (time, channel) tile
    ti = pl.program_id(2)
    o_ref[0] = jnp.dot(
        a_ref[ti], x_ref[0], preferred_element_type=jnp.float32
    ).astype(o_ref.dtype)


def _mavg_streamed_kernel(a_ref, x_ref, o_ref):
    # a_ref: (1, tl, L)   one streamed time-tile of the averaging matrix
    o_ref[0] = jnp.dot(
        a_ref[0], x_ref[0], preferred_element_type=jnp.float32
    ).astype(o_ref.dtype)


def moving_avg(x, kernel_size, stride, *, max_resident_bytes=_VMEM_WORK_BUDGET):
    """x: (B, L, C) -> (B, L_out, C), matching the PyTorch module forward."""
    b, l, c = x.shape
    pad = (kernel_size - 1) // 2
    l_out = (l + 2 * pad - kernel_size) // stride + 1
    assert l_out >= 1

    x_bytes = x.dtype.itemsize
    # bf16 inputs keep the matmul on the fast bf16 MXU path (f32 accumulation);
    # everything else stays f32 so 1/kernel_size is exact enough.
    a_dtype = "bfloat16" if x.dtype == jnp.bfloat16 else "float32"
    a_bytes = 2 if a_dtype == "bfloat16" else 4
    o_bytes = x_bytes

    # ---- channel tiling: bound the (1, L, tc) x block; 128-multiple tiles when split.
    if c <= 128 or 2 * l * c * x_bytes <= _X_BLOCK_BUDGET:
        tc, nc = c, 1
    else:
        tc = _X_BLOCK_BUDGET // (2 * l * x_bytes)
        tc = max(128, min(512, tc // 128 * 128))
        nc = pl.cdiv(c, tc)

    # ---- time tiling of the output.
    tl = l_out if l_out <= 512 else 512
    nt = pl.cdiv(l_out, tl)

    # Guarantee >=2 grid steps so both TensorCores of a v7x chip get work.
    if b * nc * nt < 2 and l_out > 8:
        tl_half = _round_up((l_out + 1) // 2, 8)
        if tl_half < l_out:
            tl = tl_half
            nt = pl.cdiv(l_out, tl)
    l_out_pad = nt * tl

    # ---- mode selection: keep the whole A VMEM-resident when it fits (A and x
    # each read from HBM exactly once); otherwise stream (tl, L) tiles of A.
    est_resident = (2 * l_out_pad * l * a_bytes      # A (budgeted double-buffered)
                    + 2 * l * tc * x_bytes           # x block
                    + 2 * tl * tc * o_bytes)         # out block
    resident = est_resident <= max_resident_bytes

    if resident:
        est = est_resident
        a = _avg_matrix(l, kernel_size, stride, nt, tl, a_dtype)
        grid = (b, nc, nt)
        in_specs = [
            # A: constant block index -> DMA'd once, resident for the whole grid.
            pl.BlockSpec((nt, tl, l), lambda bi, ci, ti: (0, 0, 0)),
            # x: constant across the inner time-tile axis -> read once from HBM.
            pl.BlockSpec((1, l, tc), lambda bi, ci, ti: (bi, 0, ci)),
        ]
        out_specs = pl.BlockSpec((1, tl, tc), lambda bi, ci, ti: (bi, ti, ci))
        kernel = _mavg_resident_kernel
    else:
        # Cap the streamed A tile so two buffers stay inside the budget.
        tl_cap = max(8, min(tl, _A_BLOCK_BUDGET // (2 * l * a_bytes) // 8 * 8))
        if tl_cap < tl:
            tl = tl_cap
            nt = pl.cdiv(l_out, tl)
            l_out_pad = nt * tl
        est = 2 * tl * l * a_bytes + 2 * l * tc * x_bytes + 2 * tl * tc * o_bytes
        a = _avg_matrix(l, kernel_size, stride, nt, tl, a_dtype)
        # Grid order: keep whichever operand saves more HBM traffic resident
        # across the inner axes (memory-bound kernel -> minimize total bytes).
        traffic_x_held = b * l * c * x_bytes + b * nc * l_out_pad * l * a_bytes
        traffic_a_held = l_out_pad * l * a_bytes + nt * b * l * c * x_bytes
        if traffic_x_held <= traffic_a_held:
            grid = (b, nc, nt)            # x held across inner time tiles
            in_specs = [
                pl.BlockSpec((1, tl, l), lambda bi, ci, ti: (ti, 0, 0)),
                pl.BlockSpec((1, l, tc), lambda bi, ci, ti: (bi, 0, ci)),
            ]
            out_specs = pl.BlockSpec((1, tl, tc), lambda bi, ci, ti: (bi, ti, ci))
        else:
            grid = (nt, b, nc)            # A tile held across inner (batch, channel)
            in_specs = [
                pl.BlockSpec((1, tl, l), lambda ti, bi, ci: (ti, 0, 0)),
                pl.BlockSpec((1, l, tc), lambda ti, bi, ci: (bi, 0, ci)),
            ]
            out_specs = pl.BlockSpec((1, tl, tc), lambda ti, bi, ci: (bi, ti, ci))
        kernel = _mavg_streamed_kernel
        # TODO(synk): band-compress A to (nt, tl, ~tl*stride+k) with a windowed
        # x read to also cut MXU flops / HBM for very long sequences.

    # Explicit VMEM limit sized from the actual budget (safe on v7x's 64 MiB).
    vmem_limit = int(min(48 * _MIB, max(32 * _MIB, 2 * est)))

    return pl.pallas_call(
        kernel,
        out_shape=jax.ShapeDtypeStruct((b, l_out, c), x.dtype),
        grid_spec=pltpu.PrefetchScalarGridSpec(
            num_scalar_prefetch=0,
            grid=grid,
            in_specs=in_specs,
            out_specs=out_specs,
        ),
        compiler_params=pltpu.CompilerParams(
            dimension_semantics=("parallel", "parallel", "parallel"),
            vmem_limit_bytes=vmem_limit,
        ),
    )(a, x)


def _moving_avg_ref(x, kernel_size, stride):
    """Pure-JAX reference mirroring the PyTorch forward (f32 accumulation)."""
    pad = (kernel_size - 1) // 2
    front = jnp.repeat(x[:, 0:1, :], pad, axis=1)
    end = jnp.repeat(x[:, -1:, :], pad, axis=1)
    xp = jnp.concatenate([front, x, end], axis=1).astype(jnp.float32)
    l_out = (xp.shape[1] - kernel_size) // stride + 1
    outs = [
        jnp.mean(xp[:, t * stride : t * stride + kernel_size, :], axis=1)
        for t in range(l_out)
    ]
    return jnp.stack(outs, axis=1)


if __name__ == "__main__":
    key = jax.random.PRNGKey(0)
    k1, k2, k3 = jax.random.split(key, 3)

    # Case 1: small f32, module defaults (resident-A path).
    x1 = jax.random.normal(k1, (2, 16, 8), dtype=jnp.float32)
    o1 = jax.block_until_ready(moving_avg(x1, 5, 1))
    r1 = _moving_avg_ref(x1, 5, 1)
    assert o1.shape == r1.shape, (o1.shape, r1.shape)
    assert jnp.max(jnp.abs(o1.astype(jnp.float32) - r1)) < 1e-4

    # Case 2: bf16 input, stride>1, batch=1 (exercises the >=2-step time split
    # for v7x and the bf16 MXU path with f32 accumulation).
    x2 = jax.random.normal(k2, (1, 32, 8), dtype=jnp.bfloat16)
    o2 = jax.block_until_ready(moving_avg(x2, 7, 3))
    r2 = _moving_avg_ref(x2, 7, 3)
    assert o2.shape == r2.shape, (o2.shape, r2.shape)
    assert jnp.max(jnp.abs(o2.astype(jnp.float32) - r2)) < 5e-2

    # Case 3: force the streamed-A fallback (long-sequence path) at a small
    # shape by shrinking the resident budget.
    x3 = jax.random.normal(k3, (2, 64, 8), dtype=jnp.float32)
    o3 = jax.block_until_ready(moving_avg(x3, 9, 2, max_resident_bytes=0))
    r3 = _moving_avg_ref(x3, 9, 2)
    assert o3.shape == r3.shape, (o3.shape, r3.shape)
    assert jnp.max(jnp.abs(o3.astype(jnp.float32) - r3)) < 1e-4

    print("KERNEL_OK")
</pallas_src>

<mosaic_0001>
module attributes {stable_mosaic.version = 11 : i64} {
  func.func @_mavg_resident_kernel(%arg0: i32, %arg1: i32, %arg2: i32, %arg3: memref<1x16x16xf32, #tpu.memory_space<vmem>>, %arg4: memref<1x16x8xf32, #tpu.memory_space<vmem>>, %arg5: memref<1x16x8xf32, #tpu.memory_space<vmem>>) attributes {dimension_semantics = [#tpu.dimension_semantics<parallel>, #tpu.dimension_semantics<parallel>, #tpu.dimension_semantics<parallel>], iteration_bounds = array<i64: 2, 1, 1>, scalar_prefetch = 0 : i64, scratch_operands = 0 : i64, tpu.core_type = #tpu.core_type<tc>, window_params = [{pipeline_mode = #tpu.pipeline_mode<synchronous>, transform_indices = @transform_0, window_bounds = array<i64: 1, 16, 16>}, {transform_indices = @transform_1, window_bounds = array<i64: 1, 16, 8>}, {transform_indices = @transform_2, window_bounds = array<i64: 1, 16, 8>}]} {
    %0 = arith.index_cast %arg2 : i32 to index
    %c0 = arith.constant 0 : index
    %c0_0 = arith.constant 0 : index
    %1 = vector.load %arg3[%0, %c0, %c0_0] : memref<1x16x16xf32, #tpu.memory_space<vmem>>, vector<1x16x16xf32>
    %2 = vector.shape_cast %1 : vector<1x16x16xf32> to vector<16x16xf32>
    %c0_1 = arith.constant 0 : index
    %c0_2 = arith.constant 0 : index
    %c0_3 = arith.constant 0 : index
    %3 = vector.load %arg4[%c0_1, %c0_2, %c0_3] : memref<1x16x8xf32, #tpu.memory_space<vmem>>, vector<1x16x8xf32>
    %4 = vector.shape_cast %3 : vector<1x16x8xf32> to vector<16x8xf32>
    %cst = arith.constant dense<0.000000e+00> : vector<16x8xf32>
    %5 = tpu.matmul %2, %4, %cst {dimension_numbers = #tpu.dot_dimension_numbers<[1], [0], [0], [1], [0, 0, 1, 1], [], []>} : vector<16x16xf32>, vector<16x8xf32>, vector<16x8xf32> -> vector<16x8xf32>
    %c0_4 = arith.constant 0 : index
    %c0_5 = arith.constant 0 : index
    %c0_6 = arith.constant 0 : index
    %6 = vector.load %arg5[%c0_4, %c0_5, %c0_6] : memref<1x16x8xf32, #tpu.memory_space<vmem>>, vector<1x16x8xf32>
    %7 = vector.shape_cast %6 : vector<1x16x8xf32> to vector<16x8xf32>
    %8 = vector.shape_cast %5 : vector<16x8xf32> to vector<1x16x8xf32>
    tpu.vector_store %arg5[%c0_4, %c0_5, %c0_6], %8 {strides = array<i32>} : memref<1x16x8xf32, #tpu.memory_space<vmem>>, vector<1x16x8xf32>,
    return
  }
  func.func @transform_0(%arg0: i32, %arg1: i32, %arg2: i32) -> (i32, i32, i32) {
    %c0_i32 = arith.constant 0 : i32
    %c0_i32_0 = arith.constant 0 : i32
    %c0_i32_1 = arith.constant 0 : i32
    %c0_i32_2 = arith.constant 0 : i32
    return %c0_i32, %c0_i32_0, %c0_i32_1 : i32, i32, i32
  }
  func.func @transform_1(%arg0: i32, %arg1: i32, %arg2: i32) -> (i32, i32, i32) {
    %c0_i32 = arith.constant 0 : i32
    %c0_i32_0 = arith.constant 0 : i32
    return %arg0, %c0_i32, %arg1 : i32, i32, i32
  }
  func.func @transform_2(%arg0: i32, %arg1: i32, %arg2: i32) -> (i32, i32, i32) {
    %c0_i32 = arith.constant 0 : i32
    return %arg0, %arg2, %arg1 : i32, i32, i32
  }
}

</mosaic_0001>

<llo_original>
// kernel: tpu_custom_call.1
$region0: #{tpu_custom_call.1}
  #allocation0 [shape = 'u32[]', space=smem, size = 0x4, offset = 0x4, fixed_abs, tag = 'smem constant byte address 0x4 - core index']
  #allocation1 [shape = 'u32[144,128]{1,0:T(1,128)}', space=vmem, size = 0x12000, scoped, tag = 'internal scratch']
  %s0 = inlined_call_operand.vmem [shape: f32[1,16,16], index: 0, kind: input, shape index: {}]
  %s1 = inlined_call_operand.vmem [shape: f32[2,16,8], index: 1, kind: input, shape index: {}]
  %s2 = inlined_call_operand.vmem [shape: f32[2,16,8], index: 2, kind: output, shape index: {}]
  %s3 = sld [smem:[#allocation0]]
  $region41: #{tpu_custom_call.1} parent=0
    _
  %s5 = ssub.s32 1, %s3
  %s6 = scalar_select 0, %s5, %s3
  loop: start=0, step=1, limit=4
  $region2: #{tpu_custom_call.1} parent=0 // loop_pre_header
    _
  $region3: #{tpu_custom_call.1} parent=0 // loop_header
    %s8 = sphi 0, %s12
    %p9 = scmp.ge.s32.totalorder %s8, 4
    %s15 = sphi 0, %s34
    %s16 = sphi 0, %s30
    %s17 = sphi 0, %s26
    %s18 = sphi 0, %s15
    %s19 = sphi 0, %s16
    %s20 = sphi 0, %s17
    %s21 = sphi 0, %s18
    %s22 = sphi 0, %s19
    %s23 = sphi 0, %s20
    %s35 = sphi 0, %s35
    %s37 = sphi 0, %s35
    %s38 = sphi 0, %s37
    %s52 = sphi 0, %s38
    %s60 = sphi 0, %s62
    %s63 = sphi 0, %s60
    %s64 = sphi 0, %s63
    %s80 = sphi 0, %s64
    %s90 = sphi 0, %s92
    %s93 = sphi 0, %s90
    %s94 = sphi 0, %s93
    %s110 = sphi 0, %s94
  $region4: #{tpu_custom_call.1} parent=0 // loop_header_branch
    %11 = sbr.rel (%p9) target = $region8
  $region5: #{tpu_custom_call.1} parent=0 // loop_body
    %s13 = ssub.s32 %s8, 1
    %s14 = ssub.s32 %s8, 2
    %s24 = sadd.s32 1, %s17
    %p25 = scmp.ge.s32.totalorder %s24, 1
    %s26 = scalar_select %p25, 0, %s24
    %s27 = sadd.s32 1, %s16
    %s28 = scalar_select %p25, %s27, %s16
    %p29 = scmp.ge.s32.totalorder %s28, 1
    %s30 = scalar_select %p29, 0, %s28
    %s31 = sadd.s32 1, %s15
    %s32 = scalar_select %p29, %s31, %s15
    %p33 = scmp.ge.s32.totalorder %s32, 2
    %s34 = scalar_select %p33, 0, %s32
    %s36 = sadd.s32 %s35, 1
    %p39 = scmp.eq.s32.totalorder %s8, 1
    %p40 = scmp.ne.s32.totalorder %s35, %s37
    %p41 = scmp.eq.s32.totalorder %s8, 0
    %p42 = por %p40, %p41
    %p43 = scmp.ne.s32.totalorder %s35, %s37
    %p44 = scmp.eq.s32.totalorder %s13, 1
    %p45 = por %p43, %p44
    %p46 = scmp.ne.s32.totalorder %s37, %s38
    %p47 = scmp.eq.s32.totalorder %s13, 0
    %p48 = por %p46, %p47
    %p49 = scmp.ne.s32.totalorder %s37, %s38
    %p50 = scmp.eq.s32.totalorder %s14, 1
    %p51 = por %p49, %p50
    %p53 = scmp.ne.s32.totalorder %s38, %s52
    %p54 = scmp.eq.s32.totalorder %s14, 0
    %p55 = por %p53, %p54
    %s56 = ssub.s32 %s15, %s34
    %s57 = ssub.s32 %s16, %s30
    %s58 = sor.u32 %s56, %s57
    %p59 = scmp.eq.s32.totalorder %s58, 0
    %s61 = sadd.s32 %s60, 1
    %s62 = scalar_select %p59, %s60, %s61
    %p65 = pneg %p59
    %p66 = scmp.eq.s32.totalorder %s8, 1
    %p67 = por %p65, %p66
    %p68 = scmp.ne.s32.totalorder %s60, %s63
    %p69 = scmp.eq.s32.totalorder %s8, 0
    %p70 = por %p68, %p69
    %p71 = scmp.ne.s32.totalorder %s60, %s63
    %p72 = scmp.eq.s32.totalorder %s13, 1
    %p73 = por %p71, %p72
    %p74 = scmp.ne.s32.totalorder %s63, %s64
    %p75 = scmp.eq.s32.totalorder %s13, 0
    %p76 = por %p74, %p75
    %p77 = scmp.ne.s32.totalorder %s63, %s64
    %p78 = scmp.eq.s32.totalorder %s14, 1
    %p79 = por %p77, %p78
    %p81 = scmp.ne.s32.totalorder %s64, %s80
    %p82 = scmp.eq.s32.totalorder %s14, 0
    %p83 = por %p81, %p82
    %s84 = ssub.s32 %s15, %s34
    %s85 = ssub.s32 %s17, %s26
    %s86 = sor.u32 %s84, %s85
    %s87 = ssub.s32 %s16, %s30
    %s88 = sor.u32 %s86, %s87
    %p89 = scmp.eq.s32.totalorder %s88, 0
    %s91 = sadd.s32 %s90, 1
    %s92 = scalar_select %p89, %s90, %s91
    %p95 = pneg %p89
    %p96 = scmp.eq.s32.totalorder %s8, 1
    %p97 = por %p95, %p96
    %p98 = scmp.ne.s32.totalorder %s90, %s93
    %p99 = scmp.eq.s32.totalorder %s8, 0
    %p100 = por %p98, %p99
    %p101 = scmp.ne.s32.totalorder %s90, %s93
    %p102 = scmp.eq.s32.totalorder %s13, 1
    %p103 = por %p101, %p102
    %p104 = scmp.ne.s32.totalorder %s93, %s94
    %p105 = scmp.eq.s32.totalorder %s13, 0
    %p106 = por %p104, %p105
    %p107 = scmp.ne.s32.totalorder %s93, %s94
    %p108 = scmp.eq.s32.totalorder %s14, 1
    %p109 = por %p107, %p108
    %p111 = scmp.ne.s32.totalorder %s94, %s110
    %p112 = scmp.eq.s32.totalorder %s14, 0
    %p113 = por %p111, %p112
    %p114 = scmp.le.s32.totalorder 1, %s8
    %p115 = scmp.lt.s32.totalorder %s8, 3
    %p116 = pnand %p114, %p115
    %p117 = pneg %p116
    // Predicated region
    $region9: #{tpu_custom_call.1} parent=5 // pred_check
      _
    $region10: #{tpu_custom_call.1} parent=5 // pred_check_branch
      %119 = sbr.rel (%p116) target = $region12
    $region11: #{tpu_custom_call.1} parent=5 // pred_region
      %s120 = ssub.s32 %s8, 1
      // Predicated region
      $region13: #{tpu_custom_call.1} parent=11 // pred_check
        %p121 = pneg %p48
      $region14: #{tpu_custom_call.1} parent=11 // pred_check_branch
        %123 = sbr.rel (%p121) target = $region16
      $region15: #{tpu_custom_call.1} parent=11 // pred_region
        _
      $region16: #{tpu_custom_call.1} parent=11 // pred_fallthru
        _
    $region12: #{tpu_custom_call.1} parent=5 // pred_fallthru
      _
    %p124 = scmp.lt.s32.totalorder %s8, 2
    // Predicated region
    $region17: #{tpu_custom_call.1} parent=5 // pred_check
      %p125 = pneg %p124
    $region18: #{tpu_custom_call.1} parent=5 // pred_check_branch
      %127 = sbr.rel (%p125) target = $region20
    $region19: #{tpu_custom_call.1} parent=5 // pred_region
      // Predicated region
      $region21: #{tpu_custom_call.1} parent=19 // pred_check
        %p128 = pneg %p70
      $region22: #{tpu_custom_call.1} parent=19 // pred_check_branch
        %130 = sbr.rel (%p128) target = $region24
      $region23: #{tpu_custom_call.1} parent=19 // pred_region
        %p131 = scmp.lt.s32.totalorder %s15, 1
        %s132 = scalar_select %p131, %s15, 1
        %p133 = scmp.lt.s32.totalorder %s16, 0
        %s134 = scalar_select %p133, %s16, 0
        %s135 = smul.addr %s132, 2
        %s136 = sadd.s32 %s134, %s135
        %s137 = smul.addr %s136, 8
        %s138 = scalar_lea.vmem %s1, %s137
      $region24: #{tpu_custom_call.1} parent=19 // pred_fallthru
        _
    $region20: #{tpu_custom_call.1} parent=5 // pred_fallthru
      _
    %p139 = scmp.le.s32.totalorder 1, %s8
    %p140 = scmp.lt.s32.totalorder %s8, 3
    %p141 = pnand %p139, %p140
    %p142 = pneg %p141
    // Predicated region
    $region25: #{tpu_custom_call.1} parent=5 // pred_check
      _
    $region26: #{tpu_custom_call.1} parent=5 // pred_check_branch
      %144 = sbr.rel (%p141) target = $region28
    $region27: #{tpu_custom_call.1} parent=5 // pred_region
      %s145 = ssub.s32 %s8, 1
      %p146 = pneg %p48
      %p147 = pneg %p45
      %p148 = scmp.lt.s32.totalorder %s18, 1
      %s149 = scalar_select %p148, %s18, 1
      %p150 = scmp.lt.s32.totalorder %s19, 0
      %s151 = scalar_select %p150, %s19, 0
      %s152 = smul.addr %s149, 2
      %s153 = sadd.s32 %s151, %s152
      %s154 = smul.addr %s153, 8
      %s155 = scalar_lea.vmem %s1, %s154
      %p156 = pneg %p76
      %p157 = pneg %p73
      %p158 = pneg %p106
      %p159 = pneg %p103
      %s160 = smul.u32 2, %s20
      %p161 = scmp.lt.s32.totalorder %s18, 1
      %s162 = scalar_select %p161, %s18, 1
      %p163 = scmp.lt.s32.totalorder %s160, 1
      %s164 = scalar_select %p163, %s160, 1
      %p165 = scmp.lt.s32.totalorder %s19, 0
      %s166 = scalar_select %p165, %s19, 0
      %s167 = sadd.s32 %s166, %s164
      %s168 = smul.addr %s162, 2
      %s169 = sadd.s32 %s167, %s168
      %s170 = smul.addr %s169, 8
      %s171 = scalar_lea.vmem %s2, %s170
      %p172 = scmp.lt.s32.totalorder %s18, 1
      %s173 = scalar_select %p172, %s18, 1
      %p174 = scmp.lt.s32.totalorder %s19, 0
      %s175 = scalar_select %p174, %s19, 0
      %s176 = smul.addr %s173, 2
      %s177 = sadd.s32 %s175, %s176
      %s178 = smul.addr %s177, 8
      %s179 = scalar_lea.vmem %s1, %s178
      %s180 = smul.u32 2, %s20
      %p181 = scmp.lt.s32.totalorder %s18, 1
      %s182 = scalar_select %p181, %s18, 1
      %p183 = scmp.lt.s32.totalorder %s180, 1
      %s184 = scalar_select %p183, %s180, 1
      %p185 = scmp.lt.s32.totalorder %s19, 0
      %s186 = scalar_select %p185, %s19, 0
      %s187 = sadd.s32 %s186, %s184
      %s188 = smul.addr %s182, 2
      %s189 = sadd.s32 %s187, %s188
      %s190 = smul.addr %s189, 8
      %s191 = scalar_lea.vmem %s2, %s190
      %s192 = smul.u32 2, %s20
      %s193 = smul.u32 %s20, 16
      %s194 = scalar_lea.vmem %s0, %s193
      %v195 = vld [vmem:[%s194] sm:$0xff]
      %v196 = vld [vmem:[%s194 + $0x8] sm:$0xff]
      %v197 = vld [vmem:[%s179] sm:$0xff]
      %v198 = vld [vmem:[%s179 + $0x8] sm:$0xff]
      %vm199 = vcmask 130048
      %v201 = vsel %vm199, %v195, 0
      %v204 = vsel %vm199, %v196, 0
      %206 = vmatprep.subr.mxu0 0.0
      %207 = vmatpush1.msra.mxu0 %v197
      %208 = vmatprep.subr.mxu0 0.0
      %209 = vmatpush1.msra.mxu0 %v198
      %210 = vmatprep.subr.mxu0 0.0
      %211 = vmatpush1.msra.mxu0 0.0
      %212 = vmatprep.subr.mxu0 0.0
      %213 = vmatpush1.msra.mxu0 0.0
      %214 = vmatprep.subr.mxu0 0.0
      %215 = vmatpush1.msra.mxu0 0.0
      %216 = vmatprep.subr.mxu0 0.0
      %217 = vmatpush1.msra.mxu0 0.0
      %218 = vmatprep.subr.mxu0 0.0
      %219 = vmatpush1.msra.mxu0 0.0
      %220 = vmatprep.subr.mxu0 0.0
      %221 = vmatpush1.msra.mxu0 0.0
      %222 = vmatprep.subr.mxu0 0.0
      %223 = vmatpush1.msra.mxu0 0.0
      %224 = vmatprep.subr.mxu0 0.0
      %225 = vmatpush1.msra.mxu0 0.0
      %226 = vmatprep.subr.mxu0 0.0
      %227 = vmatpush1.msra.mxu0 0.0
      %228 = vmatprep.subr.mxu0 0.0
      %229 = vmatpush1.msra.mxu0 0.0
      %230 = vmatprep.subr.mxu0 0.0
      %231 = vmatpush1.msra.mxu0 0.0
      %232 = vmatprep.subr.mxu0 0.0
      %233 = vmatpush1.msra.mxu0 0.0
      %234 = vmatprep.subr.mxu0 0.0
      %235 = vmatpush1.msra.mxu0 0.0
      %236 = vmatprep.subr.mxu0 0.0
      %237 = vmatpush1.msra.mxu0 0.0
      %238 = vmatprep.subr.mxu0 0.0
      %239 = vmatpush1.msra.mxu0 0.0
      %240 = vmatprep.subr.mxu0 0.0
      %241 = vmatpush1.msra.mxu0 0.0
      %242 = vmatprep.subr.mxu0 0.0
      %243 = vmatpush1.msra.mxu0 0.0
      %244 = vmatprep.subr.mxu0 0.0
      %245 = vmatpush1.msra.mxu0 0.0
      %246 = vmatprep.subr.mxu0 0.0
      %247 = vmatpush1.msra.mxu0 0.0
      %248 = vmatprep.subr.mxu0 0.0
      %249 = vmatpush1.msra.mxu0 0.0
      %250 = vmatprep.subr.mxu0 0.0
      %251 = vmatpush1.msra.mxu0 0.0
      %252 = vmatprep.subr.mxu0 0.0
      %253 = vmatpush1.msra.mxu0 0.0
      %254 = vmatprep.subr.mxu0 0.0
      %255 = vmatpush1.msra.mxu0 0.0
      %256 = vmatprep.subr.mxu0 0.0
      %257 = vmatpush1.msra.mxu0 0.0
      %258 = vmatprep.subr.mxu0 0.0
      %259 = vmatpush1.msra.mxu0 0.0
      %260 = vmatprep.subr.mxu0 0.0
      %261 = vmatpush1.msra.mxu0 0.0
      %262 = vmatprep.subr.mxu0 0.0
      %263 = vmatpush1.msra.mxu0 0.0
      %264 = vmatprep.subr.mxu0 0.0
      %265 = vmatpush1.msra.mxu0 0.0
      %266 = vmatprep.subr.mxu0 0.0
      %267 = vmatpush1.msra.mxu0 0.0
      %268 = vmatprep.subr.mxu0 0.0
      %269 = vmatpush1.msra.mxu0 0.0
      %270 = vmatprep.mubr.f32.mxu0 0.0
      %271 = vmatmul.mubr.f32.gmra.mrb[0].mxu0 %v201
      %v272 = vpop.f32.mrb[0].mxu0
      %v273 = vadd.f32 0.0, %v272
      %v274 = vpop.f32.mrb[0].mxu0
      %275 = vmatprep.mubr.f32.mxu0 0.0
      %276 = vmatmul.mubr.f32.gmra.mrb[0].mxu0 %v204
      %v277 = vpop.f32.mrb[0].mxu0
      %v278 = vadd.f32 0.0, %v277
      %v279 = vpop.f32.mrb[0].mxu0
      %280 = vdwg.mxu0
      %vm281 = vcmask 64512
      %282 = vst.msk [vmem:[%s191] sm:$0xff] %vm281, %v273
      %283 = vst.msk [vmem:[%s191 + $0x8] sm:$0xff] %vm281, %v278
      %s284 = smul.u32 2, %s20
      %p285 = scmp.lt.s32.totalorder %s18, 1
      %s286 = scalar_select %p285, %s18, 1
      %p287 = scmp.lt.s32.totalorder %s284, 1
      %s288 = scalar_select %p287, %s284, 1
      %p289 = scmp.lt.s32.totalorder %s19, 0
      %s290 = scalar_select %p289, %s19, 0
      %s291 = sadd.s32 %s290, %s288
      %s292 = smul.addr %s286, 2
      %s293 = sadd.s32 %s291, %s292
      %s294 = smul.addr %s293, 8
      %s295 = scalar_lea.vmem %s2, %s294
      // Predicated region
      $region29: #{tpu_custom_call.1} parent=27 // pred_check
        %p296 = pneg %p103
      $region30: #{tpu_custom_call.1} parent=27 // pred_check_branch
        %298 = sbr.rel (%p296) target = $region32
      $region31: #{tpu_custom_call.1} parent=27 // pred_region
        %s299 = smul.u32 2, %s20
      $region32: #{tpu_custom_call.1} parent=27 // pred_fallthru
        _
    $region28: #{tpu_custom_call.1} parent=5 // pred_fallthru
      _
    %p300 = scmp.le.s32.totalorder 2, %s8
    // Predicated region
    $region33: #{tpu_custom_call.1} parent=5 // pred_check
      %p301 = pneg %p300
    $region34: #{tpu_custom_call.1} parent=5 // pred_check_branch
      %303 = sbr.rel (%p301) target = $region36
    $region35: #{tpu_custom_call.1} parent=5 // pred_region
      %s304 = ssub.s32 %s8, 2
      // Predicated region
      $region37: #{tpu_custom_call.1} parent=35 // pred_check
        %p305 = pneg %p109
      $region38: #{tpu_custom_call.1} parent=35 // pred_check_branch
        %307 = sbr.rel (%p305) target = $region40
      $region39: #{tpu_custom_call.1} parent=35 // pred_region
        %s308 = smul.u32 2, %s23
        %p309 = scmp.lt.s32.totalorder %s21, 1
        %s310 = scalar_select %p309, %s21, 1
        %p311 = scmp.lt.s32.totalorder %s308, 1
        %s312 = scalar_select %p311, %s308, 1
        %p313 = scmp.lt.s32.totalorder %s22, 0
        %s314 = scalar_select %p313, %s22, 0
        %s315 = sadd.s32 %s314, %s312
        %s316 = smul.addr %s310, 2
        %s317 = sadd.s32 %s315, %s316
        %s318 = smul.addr %s317, 8
        %s319 = scalar_lea.vmem %s2, %s318
      $region40: #{tpu_custom_call.1} parent=35 // pred_fallthru
        _
    $region36: #{tpu_custom_call.1} parent=5 // pred_fallthru
      _
  $region6: #{tpu_custom_call.1} parent=0 // loop_footer
    %s12 = sadd.s32 1, %s8
  $region7: #{tpu_custom_call.1} parent=0 // loop_footer_branch
    %7 = sbr.rel target = $region3
  $region8: #{tpu_custom_call.1} parent=0 // loop_exit
    _

</llo_original>
